<compile_context>
chip_gen: v7x
topology: tpu7x:2x2x1
jax: 0.10.0
libtpu: 0.0.40
codegen_flags: <defaults>
</compile_context>

<pallas_src>
import functools

import jax
import jax.numpy as jnp
from jax.experimental import pallas as pl
from jax.experimental.pallas import tpu as pltpu


def _rand_kernel(seed_ref, o_ref):
    # Mix the int32 seed with a golden-ratio constant (avoids the degenerate
    # all-zero xorshift state), broadcast to a tiny (1, 1) vector, and run a
    # few rounds of xorshift32.  Only xor/shift ops -> portable lowering.
    s = seed_ref[0].astype(jnp.uint32) ^ jnp.uint32(0x9E3779B9)
    x = jnp.full((1, 1), s, dtype=jnp.uint32)
    for _ in range(4):
        x = x ^ (x << jnp.uint32(13))
        x = x ^ (x >> jnp.uint32(17))
        x = x ^ (x << jnp.uint32(5))
    # Top 24 bits -> exact non-negative int32 -> uniform f32 in [0, 1).
    hi24 = (x >> jnp.uint32(8)).astype(jnp.int32)
    o_ref[...] = hi24.astype(jnp.float32) * jnp.float32(1.0 / (1 << 24))


@jax.jit
def _baseline_rand_impl(seed_arr: jax.Array) -> jax.Array:
    out = pl.pallas_call(
        _rand_kernel,
        out_shape=jax.ShapeDtypeStruct((1, 1), jnp.float32),
        in_specs=[pl.BlockSpec(memory_space=pltpu.MemorySpace.SMEM)],
        out_specs=pl.BlockSpec(memory_space=pltpu.MemorySpace.VMEM),
        cost_estimate=pl.CostEstimate(flops=16, transcendentals=0,
                                      bytes_accessed=8),
    )(seed_arr)
    # torch.rand(1) -> shape (1,), float32.  Reshape is fused inside the jit.
    return out.reshape((1,))


def baseline_rand(x: jax.Array, seed: int = 0) -> jax.Array:
    """Pallas equivalent of BaselineRand.forward: ignores x, returns a
    uniform-random float32 array of shape (1,) in [0, 1)."""
    del x  # The PyTorch module never reads its input.
    seed_arr = jnp.asarray([seed], dtype=jnp.int32)
    return _baseline_rand_impl(seed_arr)


if __name__ == "__main__":
    key = jax.random.PRNGKey(0)
    x = jax.random.normal(key, (2, 4, 16, 16), dtype=jnp.float32)  # NCHW, unused
    out = baseline_rand(x, seed=0)
    jax.block_until_ready(out)
    assert out.shape == (1,), out.shape
    assert out.dtype == jnp.float32, out.dtype
    v = float(out[0])
    assert 0.0 <= v < 1.0, v
    # Determinism check for a fixed seed (same seed -> same sample).
    out2 = baseline_rand(x, seed=0)
    jax.block_until_ready(out2)
    assert float(out2[0]) == v, (float(out2[0]), v)
    print("KERNEL_OK")
</pallas_src>

<mosaic_0001>
module attributes {stable_mosaic.version = 11 : i64} {
  func.func @_rand_kernel(%arg0: memref<1xi32, #tpu.memory_space<smem>>, %arg1: memref<1x1xf32, #tpu.memory_space<vmem>>) attributes {dimension_semantics = [], scalar_prefetch = 0 : i64, scratch_operands = 0 : i64, tpu.core_type = #tpu.core_type<tc>} {
    %c0 = arith.constant 0 : index
    %0 = memref.load %arg0[%c0] : memref<1xi32, #tpu.memory_space<smem>>
    %c-1640531527_i32 = arith.constant -1640531527 : i32
    %1 = arith.xori %0, %c-1640531527_i32 : i32
    %2 = vector.broadcast %1 : i32 to vector<1x1xi32>
    %c13_i32 = arith.constant 13 : i32
    %3 = vector.broadcast %c13_i32 : i32 to vector<1x1xi32>
    %4 = arith.shli %2, %3 : vector<1x1xi32>
    %5 = arith.xori %2, %4 : vector<1x1xi32>
    %c17_i32 = arith.constant 17 : i32
    %6 = vector.broadcast %c17_i32 : i32 to vector<1x1xi32>
    %7 = arith.shrui %5, %6 : vector<1x1xi32>
    %8 = arith.xori %5, %7 : vector<1x1xi32>
    %c5_i32 = arith.constant 5 : i32
    %9 = vector.broadcast %c5_i32 : i32 to vector<1x1xi32>
    %10 = arith.shli %8, %9 : vector<1x1xi32>
    %11 = arith.xori %8, %10 : vector<1x1xi32>
    %c13_i32_0 = arith.constant 13 : i32
    %12 = vector.broadcast %c13_i32_0 : i32 to vector<1x1xi32>
    %13 = arith.shli %11, %12 : vector<1x1xi32>
    %14 = arith.xori %11, %13 : vector<1x1xi32>
    %c17_i32_1 = arith.constant 17 : i32
    %15 = vector.broadcast %c17_i32_1 : i32 to vector<1x1xi32>
    %16 = arith.shrui %14, %15 : vector<1x1xi32>
    %17 = arith.xori %14, %16 : vector<1x1xi32>
    %c5_i32_2 = arith.constant 5 : i32
    %18 = vector.broadcast %c5_i32_2 : i32 to vector<1x1xi32>
    %19 = arith.shli %17, %18 : vector<1x1xi32>
    %20 = arith.xori %17, %19 : vector<1x1xi32>
    %c13_i32_3 = arith.constant 13 : i32
    %21 = vector.broadcast %c13_i32_3 : i32 to vector<1x1xi32>
    %22 = arith.shli %20, %21 : vector<1x1xi32>
    %23 = arith.xori %20, %22 : vector<1x1xi32>
    %c17_i32_4 = arith.constant 17 : i32
    %24 = vector.broadcast %c17_i32_4 : i32 to vector<1x1xi32>
    %25 = arith.shrui %23, %24 : vector<1x1xi32>
    %26 = arith.xori %23, %25 : vector<1x1xi32>
    %c5_i32_5 = arith.constant 5 : i32
    %27 = vector.broadcast %c5_i32_5 : i32 to vector<1x1xi32>
    %28 = arith.shli %26, %27 : vector<1x1xi32>
    %29 = arith.xori %26, %28 : vector<1x1xi32>
    %c13_i32_6 = arith.constant 13 : i32
    %30 = vector.broadcast %c13_i32_6 : i32 to vector<1x1xi32>
    %31 = arith.shli %29, %30 : vector<1x1xi32>
    %32 = arith.xori %29, %31 : vector<1x1xi32>
    %c17_i32_7 = arith.constant 17 : i32
    %33 = vector.broadcast %c17_i32_7 : i32 to vector<1x1xi32>
    %34 = arith.shrui %32, %33 : vector<1x1xi32>
    %35 = arith.xori %32, %34 : vector<1x1xi32>
    %c5_i32_8 = arith.constant 5 : i32
    %36 = vector.broadcast %c5_i32_8 : i32 to vector<1x1xi32>
    %37 = arith.shli %35, %36 : vector<1x1xi32>
    %38 = arith.xori %35, %37 : vector<1x1xi32>
    %c8_i32 = arith.constant 8 : i32
    %39 = vector.broadcast %c8_i32 : i32 to vector<1x1xi32>
    %40 = arith.shrui %38, %39 : vector<1x1xi32>
    %41 = arith.sitofp %40 : vector<1x1xi32> to vector<1x1xf32>
    %cst = arith.constant 5.96046448E-8 : f32
    %42 = vector.broadcast %cst : f32 to vector<1x1xf32>
    %43 = arith.mulf %41, %42 : vector<1x1xf32>
    %c0_9 = arith.constant 0 : index
    %c0_10 = arith.constant 0 : index
    %44 = vector.load %arg1[%c0_9, %c0_10] : memref<1x1xf32, #tpu.memory_space<vmem>>, vector<1x1xf32>
    tpu.vector_store %arg1[%c0_9, %c0_10], %43 {strides = array<i32>} : memref<1x1xf32, #tpu.memory_space<vmem>>, vector<1x1xf32>,
    return
  }
}

</mosaic_0001>

<llo_original>
// kernel: _baseline_rand_impl.1
$region0: #{_baseline_rand_impl.1}
  #allocation0 [shape = 'u32[]', space=smem, size = 0x4, offset = 0x4, fixed_abs, tag = 'smem constant byte address 0x4 - core index']
  #allocation1 [shape = 'u32[144,128]{1,0:T(1,128)}', space=vmem, size = 0x12000, scoped, tag = 'internal scratch']
  #allocation2 [shape = 's32[1]{0:T(128)S(6)}', space=smem, size = 0x200, scoped, tag = 'scoped memory for _baseline_rand_impl.1']
  %s0 = inlined_call_operand.<no memory space> [shape: s32[1], index: 0, kind: input, shape index: {}]
  %s1 = inlined_call_operand.hbm [shape: f32[1,1], index: 1, kind: output, shape index: {}]
  %s2 = sld [smem:[#allocation0]]
  $region14: #{_baseline_rand_impl.1} parent=0
    _
  %s4 = ssub.s32 1, %s2
  %s5 = scalar_select 0, %s4, %s2
  %6 = sst [smem:[#allocation2]] %s0
  $region1: #{_baseline_rand_impl.1} parent=0
    #allocation3 [shape = 'u8[512]{0}', space=vmem, size = 0x400, scoped, tag = 'output window, operand 0, single buffered']
    #allocation4 [shape = 's32[1]{0}', space=sflag, size = 0x4, scoped, tag = 'scoped memory for _baseline_rand_impl.1']
    %7 = vsyncpa [#allocation4], 0
    // Predicated region
    $region2: #{_baseline_rand_impl.1} parent=1 // pred_check
      _
    $region3: #{_baseline_rand_impl.1} parent=1 // pred_check_branch
      %9 = sbr.rel (0) target = $region5
    $region4: #{_baseline_rand_impl.1} parent=1 // pred_region
      _
    $region5: #{_baseline_rand_impl.1} parent=1 // pred_fallthru
      _
    %s10 = sld [smem:[#allocation2]]
    %s11 = sxor.u32 %s10, 2654435769
    %v12 = vstv %s11
    %v13 = vshll.u32 %v12, 13
    %v14 = vxor.u32 %v12, %v13
    %v15 = vshrl.u32 %v14, 17
    %v16 = vxor.u32 %v14, %v15
    %v17 = vshll.u32 %v16, 5
    %v18 = vxor.u32 %v16, %v17
    %v19 = vshll.u32 %v18, 13
    %v20 = vxor.u32 %v18, %v19
    %v21 = vshrl.u32 %v20, 17
    %v22 = vxor.u32 %v20, %v21
    %v23 = vshll.u32 %v22, 5
    %v24 = vxor.u32 %v22, %v23
    %v25 = vshll.u32 %v24, 13
    %v26 = vxor.u32 %v24, %v25
    %v27 = vshrl.u32 %v26, 17
    %v28 = vxor.u32 %v26, %v27
    %v29 = vshll.u32 %v28, 5
    %v30 = vxor.u32 %v28, %v29
    %v31 = vshll.u32 %v30, 13
    %v32 = vxor.u32 %v30, %v31
    %v33 = vshrl.u32 %v32, 17
    %v34 = vxor.u32 %v32, %v33
    %v35 = vshll.u32 %v34, 5
    %v36 = vxor.u32 %v34, %v35
    %v37 = vshrl.u32 %v36, 8
    %v38 = vcvt.s32.f32 %v37
    %v39 = vmul.f32 %v38, 5.9604645e-08
    %vm40 = vcmask 0
    %41 = vst.msk [vmem:[#allocation3] sm:$0x1] %vm40, %v39
    // Predicated region
    $region6: #{_baseline_rand_impl.1} parent=1 // pred_check
      _
    $region7: #{_baseline_rand_impl.1} parent=1 // pred_check_branch
      %43 = sbr.rel (0) target = $region9
    $region8: #{_baseline_rand_impl.1} parent=1 // pred_region
      %s45 = ssub.s32 16, 16
      %46 = vsyncadd [#allocation4], %s45
      %s48 = sshll.u32 [#allocation3], 4
      %s49 = int_to_ptr.vmem [resolvable:$true] %s48
      %51 = dma.vmem_to_hbm [thread:$0]  %s49, 16, %s1, [#allocation4]
    $region9: #{_baseline_rand_impl.1} parent=1 // pred_fallthru
      _
    // Predicated region
    $region10: #{_baseline_rand_impl.1} parent=1 // pred_check
      _
    $region11: #{_baseline_rand_impl.1} parent=1 // pred_check_branch
      %53 = sbr.rel (0) target = $region13
    $region12: #{_baseline_rand_impl.1} parent=1 // pred_region
      %54 = dma.done [#allocation4], 16
    $region13: #{_baseline_rand_impl.1} parent=1 // pred_fallthru
      _
    %55 = vsyncpa [#allocation4], 1

</llo_original>
